<compile_context>
chip_gen: v7x
topology: tpu7x:2x2x1
jax: 0.10.0
libtpu: 0.0.40
codegen_flags: <defaults>
</compile_context>

<pallas_src>
import numpy as np
import jax
import jax.numpy as jnp
from jax.experimental import pallas as pl
from jax.experimental.pallas import tpu as pltpu

F_PAD = 128          # padded feature / hidden width (lane-dense)
C_PAD = 128          # padded class width (lane-dense)


# ------------------------------ small helpers --------------------------------
def _round_up(x, m):
    return ((x + m - 1) // m) * m


def _pad2d(x, rows, cols):
    r, c = x.shape
    return jnp.pad(x, ((0, rows - r), (0, cols - c)))


def _vmem_limit_bytes():
    """Per-call VMEM budget derived from the actual chip (v7x has only 64 MiB/TC)."""
    try:
        cap = int(pltpu.get_tpu_info().vmem_capacity_bytes)
    except Exception:
        cap = 64 * 1024 * 1024
    return int(min(int(0.75 * cap), 96 * 1024 * 1024))


def _choose_tm(n_pad, req):
    """Largest multiple of 128 that divides n_pad and is <= req."""
    m = n_pad // 128
    best = 128
    for d in range(1, m + 1):
        if m % d == 0 and 128 * d <= req:
            best = 128 * d
    return best


def _choose_tk(n_pad, tm, req):
    """Largest multiple of tm that divides n_pad and is <= req."""
    m = n_pad // tm
    best = tm
    for d in range(1, m + 1):
        if m % d == 0 and tm * d <= req:
            best = tm * d
    return best


def _build_tile_tables(batch_np, n, n_pad, tm, tk):
    """Per row tile: first k-tile and number of k-tiles covering this tile's graphs.

    Assumes graphs are contiguous (batch sorted).  Falls back to the full dense
    k range when the batch vector is not sorted.
    """
    nrt = n_pad // tm
    nkt = n_pad // tk
    kstart = np.zeros((nrt,), np.int32)
    kcount = np.ones((nrt,), np.int32)
    batch_np = np.asarray(batch_np)
    sorted_batch = batch_np.size == 0 or bool(np.all(np.diff(batch_np) >= 0))
    for i in range(nrt):
        r0 = i * tm
        r1 = min((i + 1) * tm, n)
        if r0 >= n:
            # Pure-padding rows: A is all-zero there, one dummy tile suffices.
            kstart[i], kcount[i] = 0, 1
            continue
        if not sorted_batch:
            kstart[i], kcount[i] = 0, nkt
            continue
        g0, g1 = batch_np[r0], batch_np[r1 - 1]
        c0 = int(np.searchsorted(batch_np, g0, side="left"))
        c1 = int(np.searchsorted(batch_np, g1, side="right"))
        ks = c0 // tk
        ke = -(-c1 // tk)
        kstart[i] = ks
        kcount[i] = max(1, ke - ks)
    return kstart, kcount


# ----------------------------- Pallas kernels --------------------------------
def transform_kernel(x_ref, w_ref, o_ref):
    """HW1 = X @ W1  (first-layer feature transform, lane-dense bf16 output)."""
    o_ref[...] = jnp.dot(x_ref[...], w_ref[...],
                         preferred_element_type=jnp.float32).astype(o_ref.dtype)


def agg_fused_kernel(kstart_ref, kcount_ref, a_ref, hw_ref, b_ref, wnext_ref,
                     o_ref, acc_ref):
    """One GCN layer fused with the next layer's feature transform.

    acc_i = sum over this row-tile's nonzero k-tiles of  A[i,k] @ HW[k]
    H_i   = relu(acc_i + b)            (dropout == identity in eval mode)
    out_i = H_i @ W_next               (bf16 epilogue, input of the next layer)
    """
    i = pl.program_id(0)
    k = pl.program_id(1)

    @pl.when(k == 0)
    def _():
        acc_ref[...] = jnp.zeros_like(acc_ref)

    # Skip the (clamped, re-fetch-free) padding steps beyond this row's k range.
    @pl.when(k < kcount_ref[i])
    def _():
        acc_ref[...] += jnp.dot(a_ref[...], hw_ref[...],
                                preferred_element_type=jnp.float32)

    @pl.when(k == pl.num_programs(1) - 1)
    def _():
        h = jnp.maximum(acc_ref[...] + b_ref[...], 0.0).astype(jnp.bfloat16)
        o_ref[...] = jnp.dot(h, wnext_ref[...],
                             preferred_element_type=jnp.float32).astype(o_ref.dtype)


def agg_last_kernel(kstart_ref, kcount_ref, a_ref, hw_ref, b_ref, o_ref, acc_ref):
    """Last GCN layer: H3 = relu(A @ HW3 + b3), emitted in bf16 for the head."""
    i = pl.program_id(0)
    k = pl.program_id(1)

    @pl.when(k == 0)
    def _():
        acc_ref[...] = jnp.zeros_like(acc_ref)

    @pl.when(k < kcount_ref[i])
    def _():
        acc_ref[...] += jnp.dot(a_ref[...], hw_ref[...],
                                preferred_element_type=jnp.float32)

    @pl.when(k == pl.num_programs(1) - 1)
    def _():
        o_ref[...] = jnp.maximum(acc_ref[...] + b_ref[...], 0.0).astype(o_ref.dtype)


def head_kernel(p_ref, h_ref, wf_ref, bf_ref, o_ref, acc_ref):
    """logits = (P @ H3) @ Wf + bf, with P/H3 streamed over node tiles."""
    k = pl.program_id(0)

    @pl.when(k == 0)
    def _():
        acc_ref[...] = jnp.zeros_like(acc_ref)

    acc_ref[...] += jnp.dot(p_ref[...], h_ref[...],
                            preferred_element_type=jnp.float32)

    @pl.when(k == pl.num_programs(0) - 1)
    def _():
        o_ref[...] = jnp.dot(acc_ref[...], wf_ref[...],
                             preferred_element_type=jnp.float32) + bf_ref[...]


# --------------------------- pallas_call wrappers -----------------------------
def _transform_call(x_pad, w_pad, tm, vmem_limit):
    n_pad = x_pad.shape[0]
    return pl.pallas_call(
        transform_kernel,
        out_shape=jax.ShapeDtypeStruct((n_pad, F_PAD), jnp.bfloat16),
        grid=(n_pad // tm,),
        in_specs=[pl.BlockSpec((tm, F_PAD), lambda i: (i, 0)),
                  pl.BlockSpec((F_PAD, F_PAD), lambda i: (0, 0))],
        out_specs=pl.BlockSpec((tm, F_PAD), lambda i: (i, 0)),
        compiler_params=pltpu.CompilerParams(
            dimension_semantics=("parallel",),
            vmem_limit_bytes=vmem_limit),
    )(x_pad, w_pad)


def _agg_call(a_pad, hw, b_pad, kstart, kcount, kcount_np, tm, tk, vmem_limit,
              w_next=None):
    n_pad = a_pad.shape[0]
    max_kc = max(1, int(kcount_np.max()))
    grid = (n_pad // tm, max_kc)

    # Data-dependent k indexing: clamp to the last valid tile of this row's graph
    # block; the repeated block index makes Pallas skip the redundant DMA, and the
    # in-kernel pl.when guard skips the redundant accumulate.
    def a_map(i, k, ks_ref, kc_ref):
        return (i, ks_ref[i] + jnp.minimum(k, kc_ref[i] - 1))

    def hw_map(i, k, ks_ref, kc_ref):
        return (ks_ref[i] + jnp.minimum(k, kc_ref[i] - 1), 0)

    def const_map(i, k, ks_ref, kc_ref):
        return (0, 0)

    def out_map(i, k, ks_ref, kc_ref):
        return (i, 0)

    in_specs = [
        pl.BlockSpec((tm, tk), a_map),          # streamed bf16 A tiles (nonzero only)
        pl.BlockSpec((tk, F_PAD), hw_map),      # k-streamed HW tiles (no N-VMEM ceiling)
        pl.BlockSpec((1, F_PAD), const_map),    # bias
    ]
    args = [a_pad, hw, b_pad]
    kernel = agg_last_kernel
    if w_next is not None:
        in_specs.append(pl.BlockSpec((F_PAD, F_PAD), const_map))
        args.append(w_next)
        kernel = agg_fused_kernel

    nz_tiles = int(kcount_np.sum())
    flops = 2 * nz_tiles * tm * tk * F_PAD
    if w_next is not None:
        flops += 2 * n_pad * F_PAD * F_PAD
    bytes_accessed = int(nz_tiles * (tm * tk + tk * F_PAD) * 2 + n_pad * F_PAD * 2)

    return pl.pallas_call(
        kernel,
        out_shape=jax.ShapeDtypeStruct((n_pad, F_PAD), jnp.bfloat16),
        grid_spec=pltpu.PrefetchScalarGridSpec(
            num_scalar_prefetch=2,
            grid=grid,
            in_specs=in_specs,
            out_specs=pl.BlockSpec((tm, F_PAD), out_map),
            scratch_shapes=[pltpu.VMEM((tm, F_PAD), jnp.float32)]),
        compiler_params=pltpu.CompilerParams(
            dimension_semantics=("parallel", "arbitrary"),
            vmem_limit_bytes=vmem_limit),
        cost_estimate=pl.CostEstimate(flops=int(flops), transcendentals=0,
                                      bytes_accessed=bytes_accessed),
    )(kstart, kcount, *args)


def _head_call(p_pad, h3, wf_pad, bf_pad, tk, vmem_limit):
    g_pad, n_pad = p_pad.shape
    return pl.pallas_call(
        head_kernel,
        out_shape=jax.ShapeDtypeStruct((g_pad, C_PAD), jnp.float32),
        grid=(n_pad // tk,),
        in_specs=[pl.BlockSpec((g_pad, tk), lambda k: (0, k)),
                  pl.BlockSpec((tk, F_PAD), lambda k: (k, 0)),
                  pl.BlockSpec((F_PAD, C_PAD), lambda k: (0, 0)),
                  pl.BlockSpec((1, C_PAD), lambda k: (0, 0))],
        out_specs=pl.BlockSpec((g_pad, C_PAD), lambda k: (0, 0)),
        scratch_shapes=[pltpu.VMEM((g_pad, F_PAD), jnp.float32)],
        compiler_params=pltpu.CompilerParams(
            dimension_semantics=("arbitrary",),
            vmem_limit_bytes=vmem_limit),
    )(p_pad, h3, wf_pad, bf_pad)


# ------------------------------ forward pass ----------------------------------
def gcn_forward_pallas(a_hat, x, params, pool_mat, batch, num_classes,
                       *, tm=1024, tk=2048):
    (w1, b1, w2, b2, w3, b3, wf, bf) = params
    n = x.shape[0]
    g = pool_mat.shape[0]

    # Padding: round to 128 only; tiles are chosen to divide n_pad (no lcm blowup).
    n_pad = _round_up(n, 128)
    g_pad = _round_up(g, 8)
    tm = _choose_tm(n_pad, tm)
    tk = _choose_tk(n_pad, tm, tk)
    vmem_limit = _vmem_limit_bytes()

    # Block-diagonal skip tables (host-side, from the graph-membership vector).
    batch_np = np.asarray(jax.device_get(batch))
    kstart_np, kcount_np = _build_tile_tables(batch_np, n, n_pad, tm, tk)
    kstart = jnp.asarray(kstart_np)
    kcount = jnp.asarray(kcount_np)

    bf16, f32 = jnp.bfloat16, jnp.float32
    a_pad = _pad2d(a_hat, n_pad, n_pad).astype(bf16)     # dominant streamed operand
    x_pad = _pad2d(x, n_pad, F_PAD).astype(bf16)
    w1_p = _pad2d(w1, F_PAD, F_PAD).astype(bf16)
    w2_p = _pad2d(w2, F_PAD, F_PAD).astype(bf16)
    w3_p = _pad2d(w3, F_PAD, F_PAD).astype(bf16)
    b1_p = _pad2d(b1, 1, F_PAD).astype(f32)
    b2_p = _pad2d(b2, 1, F_PAD).astype(f32)
    b3_p = _pad2d(b3, 1, F_PAD).astype(f32)
    wf_p = _pad2d(wf, F_PAD, C_PAD).astype(f32)
    bf_p = _pad2d(bf, 1, C_PAD).astype(f32)
    p_pad = _pad2d(pool_mat, g_pad, n_pad).astype(bf16)

    hw1 = _transform_call(x_pad, w1_p, tm, vmem_limit)                   # X @ W1
    hw2 = _agg_call(a_pad, hw1, b1_p, kstart, kcount, kcount_np, tm, tk,
                    vmem_limit, w_next=w2_p)                             # relu(A@HW1+b1)@W2
    hw3 = _agg_call(a_pad, hw2, b2_p, kstart, kcount, kcount_np, tm, tk,
                    vmem_limit, w_next=w3_p)                             # relu(A@HW2+b2)@W3
    h3 = _agg_call(a_pad, hw3, b3_p, kstart, kcount, kcount_np, tm, tk,
                   vmem_limit, w_next=None)                              # relu(A@HW3+b3)
    out = _head_call(p_pad, h3, wf_p, bf_p, tk, vmem_limit)[:g, :num_classes]

    if num_classes == 1:
        return out.reshape(-1)
    return out


# ------------------------------- JAX glue ------------------------------------
def build_normalized_adjacency(edge_index, edge_weight, num_nodes):
    """A_hat = D^{-1/2} (A + I) D^{-1/2} with weighted edges and self-loop weight 1."""
    src, dst = edge_index[0], edge_index[1]
    adj = jnp.zeros((num_nodes, num_nodes), jnp.float32)
    # GCNConv aggregates messages from source j into target i: A[i, j] = w(j->i)
    adj = adj.at[dst, src].add(edge_weight)
    adj = adj + jnp.eye(num_nodes, dtype=jnp.float32)  # self loops, weight 1
    deg = jnp.sum(adj, axis=1)
    dinv = jnp.where(deg > 0, 1.0 / jnp.sqrt(deg), 0.0)
    return dinv[:, None] * adj * dinv[None, :]


def build_pool_matrix(batch, num_graphs, num_nodes):
    """P[g, n] = 1/|{n: batch[n]==g}| if batch[n]==g else 0."""
    onehot = (batch[None, :] == jnp.arange(num_graphs)[:, None]).astype(jnp.float32)
    counts = jnp.maximum(jnp.sum(onehot, axis=1, keepdims=True), 1.0)
    return onehot / counts


def init_params(key, num_node_features, num_classes):
    def glorot(k, fan_in, fan_out):
        lim = jnp.sqrt(6.0 / (fan_in + fan_out))
        return jax.random.uniform(k, (fan_in, fan_out), jnp.float32, -lim, lim)

    ks = jax.random.split(key, 8)
    w1 = glorot(ks[0], num_node_features, 16)
    b1 = 0.1 * jax.random.normal(ks[1], (1, 16), jnp.float32)
    w2 = glorot(ks[2], 16, 32)
    b2 = 0.1 * jax.random.normal(ks[3], (1, 32), jnp.float32)
    w3 = glorot(ks[4], 32, 64)
    b3 = 0.1 * jax.random.normal(ks[5], (1, 64), jnp.float32)
    wf = glorot(ks[6], 64, num_classes)
    bf = 0.1 * jax.random.normal(ks[7], (1, num_classes), jnp.float32)
    return (w1, b1, w2, b2, w3, b3, wf, bf)


def reference_forward(a_hat, x, params, pool_mat, num_classes):
    (w1, b1, w2, b2, w3, b3, wf, bf) = params
    h = jnp.maximum(a_hat @ (x @ w1) + b1, 0.0)
    h = jnp.maximum(a_hat @ (h @ w2) + b2, 0.0)
    h = jnp.maximum(a_hat @ (h @ w3) + b3, 0.0)
    out = (pool_mat @ h) @ wf + bf
    return out.reshape(-1) if num_classes == 1 else out


if __name__ == "__main__":
    key = jax.random.PRNGKey(0)
    num_node_features = 4
    num_classes = 3
    num_nodes = 16
    num_graphs = 2
    num_edges = 32

    k_x, k_e, k_w, k_p = jax.random.split(key, 4)

    # Synthetic graph batch: 16 nodes split into 2 contiguous graphs of 8 nodes.
    x = jax.random.normal(k_x, (num_nodes, num_node_features), jnp.float32)
    batch = jnp.concatenate([jnp.zeros(8, jnp.int32), jnp.ones(8, jnp.int32)])

    # Random intra-graph edges (each edge stays within its graph's node range).
    e = jax.random.randint(k_e, (2, num_edges), 0, 8)
    graph_of_edge = (jnp.arange(num_edges) % 2) * 8
    edge_index = e + graph_of_edge[None, :]
    edge_weight = jax.random.uniform(k_w, (num_edges,), jnp.float32, 0.1, 1.0)

    a_hat = build_normalized_adjacency(edge_index, edge_weight, num_nodes)
    pool_mat = build_pool_matrix(batch, num_graphs, num_nodes)
    params = init_params(k_p, num_node_features, num_classes)

    out = gcn_forward_pallas(a_hat, x, params, pool_mat, batch, num_classes)
    jax.block_until_ready(out)

    ref = reference_forward(a_hat, x, params, pool_mat, num_classes)
    assert out.shape == (num_graphs, num_classes)
    # A_hat, X, weights and intermediate activations stream in bf16 -> ~1e-2 rel err.
    assert jnp.allclose(out, ref, atol=5e-2, rtol=5e-2), (out, ref)

    print("KERNEL_OK")
</pallas_src>

<mosaic_0001>
module attributes {stable_mosaic.version = 11 : i64} {
  func.func @transform_kernel(%arg0: i32, %arg1: memref<128x128xbf16, #tpu.memory_space<vmem>>, %arg2: memref<128x128xbf16, #tpu.memory_space<vmem>>, %arg3: memref<128x128xbf16, #tpu.memory_space<vmem>>) attributes {dimension_semantics = [#tpu.dimension_semantics<parallel>], iteration_bounds = array<i64: 1>, scalar_prefetch = 0 : i64, scratch_operands = 0 : i64, tpu.core_type = #tpu.core_type<tc>, window_params = [{transform_indices = @transform_0, window_bounds = array<i64: 128, 128>}, {pipeline_mode = #tpu.pipeline_mode<synchronous>, transform_indices = @transform_1, window_bounds = array<i64: 128, 128>}, {transform_indices = @transform_2, window_bounds = array<i64: 128, 128>}]} {
    %c0 = arith.constant 0 : index
    %c0_0 = arith.constant 0 : index
    %0 = vector.load %arg1[%c0, %c0_0] : memref<128x128xbf16, #tpu.memory_space<vmem>>, vector<128x128xbf16>
    %c0_1 = arith.constant 0 : index
    %c0_2 = arith.constant 0 : index
    %1 = vector.load %arg2[%c0_1, %c0_2] : memref<128x128xbf16, #tpu.memory_space<vmem>>, vector<128x128xbf16>
    %cst = arith.constant dense<0.000000e+00> : vector<128x128xf32>
    %2 = tpu.matmul %0, %1, %cst {dimension_numbers = #tpu.dot_dimension_numbers<[1], [0], [0], [1], [0, 0, 1, 1], [], []>} : vector<128x128xbf16>, vector<128x128xbf16>, vector<128x128xf32> -> vector<128x128xf32>
    %3 = arith.truncf %2 : vector<128x128xf32> to vector<128x128xbf16>
    %c0_3 = arith.constant 0 : index
    %c0_4 = arith.constant 0 : index
    %4 = vector.load %arg3[%c0_3, %c0_4] : memref<128x128xbf16, #tpu.memory_space<vmem>>, vector<128x128xbf16>
    tpu.vector_store %arg3[%c0_3, %c0_4], %3 {strides = array<i32>} : memref<128x128xbf16, #tpu.memory_space<vmem>>, vector<128x128xbf16>,
    return
  }
  func.func @transform_0(%arg0: i32) -> (i32, i32) {
    %c0_i32 = arith.constant 0 : i32
    %c0_i32_0 = arith.constant 0 : i32
    return %arg0, %c0_i32 : i32, i32
  }
  func.func @transform_1(%arg0: i32) -> (i32, i32) {
    %c0_i32 = arith.constant 0 : i32
    %c0_i32_0 = arith.constant 0 : i32
    %c0_i32_1 = arith.constant 0 : i32
    return %c0_i32, %c0_i32_0 : i32, i32
  }
  func.func @transform_2(%arg0: i32) -> (i32, i32) {
    %c0_i32 = arith.constant 0 : i32
    %c0_i32_0 = arith.constant 0 : i32
    return %arg0, %c0_i32 : i32, i32
  }
}

</mosaic_0001>

<llo_original>
// kernel: tpu_custom_call.1
$region0: #{tpu_custom_call.1}
  #allocation0 [shape = 'u32[]', space=smem, size = 0x4, offset = 0x4, fixed_abs, tag = 'smem constant byte address 0x4 - core index']
  #allocation1 [shape = 'u32[144,128]{1,0:T(1,128)}', space=vmem, size = 0x12000, scoped, tag = 'internal scratch']
  %s0 = inlined_call_operand.hbm [shape: bf16[128,128], index: 0, kind: input, shape index: {}]
  %s1 = inlined_call_operand.hbm [shape: bf16[128,128], index: 1, kind: input, shape index: {}]
  %s2 = inlined_call_operand.hbm [shape: bf16[128,128], index: 2, kind: output, shape index: {}]
  %s3 = sld [smem:[#allocation0]]
  $region26: #{tpu_custom_call.1} parent=0
    _
  %s5 = ssub.s32 1, %s3
  %s6 = scalar_select 0, %s5, %s3
  $region1: #{tpu_custom_call.1} parent=0
    #allocation2 [shape = 'u8[32768]{0}', space=vmem, size = 0x8000, scoped, tag = 'input window, operand 0, single buffered']
    #allocation3 [shape = 's32[1]{0}', space=sflag, size = 0x4, scoped, tag = 'scoped memory for tpu_custom_call.1']
    #allocation4 [shape = 's32[1]{0}', space=sflag, size = 0x4, scoped, tag = 'scoped memory for tpu_custom_call.1']
    #allocation5 [shape = 'u8[32768]{0}', space=vmem, size = 0x8000, scoped, tag = 'input window, operand 1, single buffered']
    #allocation6 [shape = 's32[1]{0}', space=sflag, size = 0x4, scoped, tag = 'scoped memory for tpu_custom_call.1']
    #allocation7 [shape = 'u8[32768]{0}', space=vmem, size = 0x8000, scoped, tag = 'output window, operand 0, single buffered']
    %7 = vsyncpa [#allocation3], 0
    %8 = vsyncpa [#allocation6], 0
    %9 = vsyncpa [#allocation4], 0
    // Predicated region
    $region2: #{tpu_custom_call.1} parent=1 // pred_check
      _
    $region3: #{tpu_custom_call.1} parent=1 // pred_check_branch
      %11 = sbr.rel (0) target = $region5
    $region4: #{tpu_custom_call.1} parent=1 // pred_region
      %s13 = ssub.s32 1024, 1024
      %14 = vsyncadd [#allocation3], %s13
      %s15 = sshll.u32 [#allocation2], 4
      %s16 = int_to_ptr.vmem [resolvable:$true] %s15
      %21 = dma.hbm_to_vmem [thread:$0]  %s0, 1024, %s16, [#allocation3], 64, 64, 4
    $region5: #{tpu_custom_call.1} parent=1 // pred_fallthru
      _
    // Predicated region
    $region6: #{tpu_custom_call.1} parent=1 // pred_check
      _
    $region7: #{tpu_custom_call.1} parent=1 // pred_check_branch
      %23 = sbr.rel (0) target = $region9
    $region8: #{tpu_custom_call.1} parent=1 // pred_region
      %s25 = ssub.s32 1024, 1024
      %26 = vsyncadd [#allocation6], %s25
      %s27 = sshll.u32 [#allocation5], 4
      %s28 = int_to_ptr.vmem [resolvable:$true] %s27
      %33 = dma.hbm_to_vmem [thread:$0]  %s1, 1024, %s28, [#allocation6], 64, 64, 4
    $region9: #{tpu_custom_call.1} parent=1 // pred_fallthru
      _
    // Predicated region
    $region10: #{tpu_custom_call.1} parent=1 // pred_check
      _
    $region11: #{tpu_custom_call.1} parent=1 // pred_check_branch
      %35 = sbr.rel (0) target = $region13
    $region12: #{tpu_custom_call.1} parent=1 // pred_region
      %36 = dma.done [#allocation3], 1024
    $region13: #{tpu_custom_call.1} parent=1 // pred_fallthru
      _
    // Predicated region
    $region14: #{tpu_custom_call.1} parent=1 // pred_check
      _
    $region15: #{tpu_custom_call.1} parent=1 // pred_check_branch
      %38 = sbr.rel (0) target = $region17
    $region16: #{tpu_custom_call.1} parent=1 // pred_region
      %39 = dma.done [#allocation6], 1024
    $region17: #{tpu_custom_call.1} parent=1 // pred_fallthru
      _
    %v41 = vld [vmem:[#allocation2] sm:$0xf]
    %v42 = vld [vmem:[#allocation2 + $0x4] sm:$0xf]
    %v43 = vld [vmem:[#allocation2 + $0x8] sm:$0xf]
    %v44 = vld [vmem:[#allocation2 + $0xc] sm:$0xf]
    %v45 = vld [vmem:[#allocation2 + $0x10] sm:$0xf]
    %v46 = vld [vmem:[#allocation2 + $0x14] sm:$0xf]
    %v47 = vld [vmem:[#allocation2 + $0x18] sm:$0xf]
    %v48 = vld [vmem:[#allocation2 + $0x1c] sm:$0xf]
    %v49 = vld [vmem:[#allocation2 + $0x20] sm:$0xf]
    %v50 = vld [vmem:[#allocation2 + $0x24] sm:$0xf]
    %v51 = vld [vmem:[#allocation2 + $0x28] sm:$0xf]
    %v52 = vld [vmem:[#allocation2 + $0x2c] sm:$0xf]
    %v53 = vld [vmem:[#allocation2 + $0x30] sm:$0xf]
    %v54 = vld [vmem:[#allocation2 + $0x34] sm:$0xf]
    %v55 = vld [vmem:[#allocation2 + $0x38] sm:$0xf]
    %v56 = vld [vmem:[#allocation2 + $0x3c] sm:$0xf]
    %v57 = vld [vmem:[#allocation5] sm:$0xf]
    %v58 = vld [vmem:[#allocation5 + $0x4] sm:$0xf]
    %v59 = vld [vmem:[#allocation5 + $0x8] sm:$0xf]
    %v60 = vld [vmem:[#allocation5 + $0xc] sm:$0xf]
    %v61 = vld [vmem:[#allocation5 + $0x10] sm:$0xf]
    %v62 = vld [vmem:[#allocation5 + $0x14] sm:$0xf]
    %v63 = vld [vmem:[#allocation5 + $0x18] sm:$0xf]
    %v64 = vld [vmem:[#allocation5 + $0x1c] sm:$0xf]
    %v65 = vld [vmem:[#allocation5 + $0x20] sm:$0xf]
    %v66 = vld [vmem:[#allocation5 + $0x24] sm:$0xf]
    %v67 = vld [vmem:[#allocation5 + $0x28] sm:$0xf]
    %v68 = vld [vmem:[#allocation5 + $0x2c] sm:$0xf]
    %v69 = vld [vmem:[#allocation5 + $0x30] sm:$0xf]
    %v70 = vld [vmem:[#allocation5 + $0x34] sm:$0xf]
    %v71 = vld [vmem:[#allocation5 + $0x38] sm:$0xf]
    %v72 = vld [vmem:[#allocation5 + $0x3c] sm:$0xf]
    %v89 = vunpack.c.l.b16 %v41
    %v90 = vunpack.c.l.b16 %v42
    %v91 = vunpack.c.l.b16 %v43
    %v92 = vunpack.c.l.b16 %v44
    %v93 = vunpack.c.l.b16 %v45
    %v94 = vunpack.c.l.b16 %v46
    %v95 = vunpack.c.l.b16 %v47
    %v96 = vunpack.c.l.b16 %v48
    %v97 = vunpack.c.l.b16 %v49
    %v98 = vunpack.c.l.b16 %v50
    %v99 = vunpack.c.l.b16 %v51
    %v100 = vunpack.c.l.b16 %v52
    %v101 = vunpack.c.l.b16 %v53
    %v102 = vunpack.c.l.b16 %v54
    %v103 = vunpack.c.l.b16 %v55
    %v104 = vunpack.c.l.b16 %v56
    %v105 = vpack.c.b16 %v90, %v89
    %v106 = vpack.c.b16 %v92, %v91
    %v107 = vpack.c.b16 %v94, %v93
    %v108 = vpack.c.b16 %v96, %v95
    %v109 = vpack.c.b16 %v98, %v97
    %v110 = vpack.c.b16 %v100, %v99
    %v111 = vpack.c.b16 %v102, %v101
    %v112 = vpack.c.b16 %v104, %v103
    %v137 = vunpack.c.l.b16 %v57
    %v138 = vunpack.c.l.b16 %v58
    %v139 = vunpack.c.l.b16 %v59
    %v140 = vunpack.c.l.b16 %v60
    %v141 = vunpack.c.l.b16 %v61
    %v142 = vunpack.c.l.b16 %v62
    %v143 = vunpack.c.l.b16 %v63
    %v144 = vunpack.c.l.b16 %v64
    %v145 = vunpack.c.l.b16 %v65
    %v146 = vunpack.c.l.b16 %v66
    %v147 = vunpack.c.l.b16 %v67
    %v148 = vunpack.c.l.b16 %v68
    %v149 = vunpack.c.l.b16 %v69
    %v150 = vunpack.c.l.b16 %v70
    %v151 = vunpack.c.l.b16 %v71
    %v152 = vunpack.c.l.b16 %v72
    %v153 = vpack.c.b16 %v138, %v137
    %v154 = vpack.c.b16 %v140, %v139
    %v155 = vpack.c.b16 %v142, %v141
    %v156 = vpack.c.b16 %v144, %v143
    %v157 = vpack.c.b16 %v146, %v145
    %v158 = vpack.c.b16 %v148, %v147
    %v159 = vpack.c.b16 %v150, %v149
    %v160 = vpack.c.b16 %v152, %v151
    %169 = vmatprep.subr.bf16.mxu0 0
    %170 = vmatpush1.bf16.msra.mxu0 %v153
    %171 = vmatprep.subr.bf16.mxu0 0
    %172 = vmatpush1.bf16.msra.mxu0 %v154
    %173 = vmatprep.subr.bf16.mxu0 0
    %174 = vmatpush1.bf16.msra.mxu0 %v155
    %175 = vmatprep.subr.bf16.mxu0 0
    %176 = vmatpush1.bf16.msra.mxu0 %v156
    %177 = vmatprep.subr.bf16.mxu0 0
    %178 = vmatpush1.bf16.msra.mxu0 %v157
    %179 = vmatprep.subr.bf16.mxu0 0
    %180 = vmatpush1.bf16.msra.mxu0 %v158
    %181 = vmatprep.subr.bf16.mxu0 0
    %182 = vmatpush1.bf16.msra.mxu0 %v159
    %183 = vmatprep.subr.bf16.mxu0 0
    %184 = vmatpush1.bf16.msra.mxu0 %v160
    %185 = vmatprep.subr.bf16.mxu0 0
    %186 = vmatpush1.bf16.msra.mxu0 0
    %187 = vmatprep.subr.bf16.mxu0 0
    %188 = vmatpush1.bf16.msra.mxu0 0
    %189 = vmatprep.subr.bf16.mxu0 0
    %190 = vmatpush1.bf16.msra.mxu0 0
    %191 = vmatprep.subr.bf16.mxu0 0
    %192 = vmatpush1.bf16.msra.mxu0 0
    %193 = vmatprep.subr.bf16.mxu0 0
    %194 = vmatpush1.bf16.msra.mxu0 0
    %195 = vmatprep.subr.bf16.mxu0 0
    %196 = vmatpush1.bf16.msra.mxu0 0
    %197 = vmatprep.subr.bf16.mxu0 0
    %198 = vmatpush1.bf16.msra.mxu0 0
    %199 = vmatprep.subr.bf16.mxu0 0
    %200 = vmatpush1.bf16.msra.mxu0 0
    %201 = vmatprep.mubr.bf16.mxu0 0
    %202 = vmatmul.mubr.bf16.gmra.mrb[0].mxu0 %v105
    %v203 = vpop.f32.mrb[0].mxu0
    %v204 = vadd.f32 0.0, %v203
    %v205 = vpop.f32.mrb[0].mxu0
    %v206 = vpop.f32.mrb[0].mxu0
    %v207 = vadd.f32 0.0, %v206
    %v208 = vpop.f32.mrb[0].mxu0
    %209 = vmatprep.mubr.bf16.mxu0 0
    %210 = vmatmul.mubr.bf16.gmra.mrb[0].mxu0 %v106
    %v211 = vpop.f32.mrb[0].mxu0
    %v212 = vadd.f32 0.0, %v211
    %v213 = vpop.f32.mrb[0].mxu0
    %v214 = vpop.f32.mrb[0].mxu0
    %v215 = vadd.f32 0.0, %v214
    %v216 = vpop.f32.mrb[0].mxu0
    %217 = vmatprep.mubr.bf16.mxu0 0
    %218 = vmatmul.mubr.bf16.gmra.mrb[0].mxu0 %v107
    %v219 = vpop.f32.mrb[0].mxu0
    %v220 = vadd.f32 0.0, %v219
    %v221 = vpop.f32.mrb[0].mxu0
    %v222 = vpop.f32.mrb[0].mxu0
    %v223 = vadd.f32 0.0, %v222
    %v224 = vpop.f32.mrb[0].mxu0
    %225 = vmatprep.mubr.bf16.mxu0 0
    %226 = vmatmul.mubr.bf16.gmra.mrb[0].mxu0 %v108
    %v227 = vpop.f32.mrb[0].mxu0
    %v228 = vadd.f32 0.0, %v227
    %v229 = vpop.f32.mrb[0].mxu0
    %v230 = vpop.f32.mrb[0].mxu0
    %v231 = vadd.f32 0.0, %v230
    %v232 = vpop.f32.mrb[0].mxu0
    %233 = vmatprep.mubr.bf16.mxu0 0
    %234 = vmatmul.mubr.bf16.gmra.mrb[0].mxu0 %v109
    %v235 = vpop.f32.mrb[0].mxu0
    %v236 = vadd.f32 0.0, %v235
    %v237 = vpop.f32.mrb[0].mxu0
    %v238 = vpop.f32.mrb[0].mxu0
    %v239 = vadd.f32 0.0, %v238
    %v240 = vpop.f32.mrb[0].mxu0
    %241 = vmatprep.mubr.bf16.mxu0 0
    %242 = vmatmul.mubr.bf16.gmra.mrb[0].mxu0 %v110
    %v243 = vpop.f32.mrb[0].mxu0
    %v244 = vadd.f32 0.0, %v243
    %v245 = vpop.f32.mrb[0].mxu0
    %v246 = vpop.f32.mrb[0].mxu0
    %v247 = vadd.f32 0.0, %v246
    %v248 = vpop.f32.mrb[0].mxu0
    %249 = vmatprep.mubr.bf16.mxu0 0
    %250 = vmatmul.mubr.bf16.gmra.mrb[0].mxu0 %v111
    %v251 = vpop.f32.mrb[0].mxu0
    %v252 = vadd.f32 0.0, %v251
    %v253 = vpop.f32.mrb[0].mxu0
    %v254 = vpop.f32.mrb[0].mxu0
    %v255 = vadd.f32 0.0, %v254
    %v256 = vpop.f32.mrb[0].mxu0
    %257 = vmatprep.mubr.bf16.mxu0 0
    %258 = vmatmul.mubr.bf16.gmra.mrb[0].mxu0 %v112
    %v259 = vpop.f32.mrb[0].mxu0
    %v260 = vadd.f32 0.0, %v259
    %v261 = vpop.f32.mrb[0].mxu0
    %v262 = vpop.f32.mrb[0].mxu0
    %v263 = vadd.f32 0.0, %v262
    %v264 = vpop.f32.mrb[0].mxu0
    %265 = vdwg.mxu0
    %v266 = vpack.c.bf16 %v207, %v204
    %v267 = vpack.c.bf16 %v215, %v212
    %v268 = vpack.c.bf16 %v223, %v220
    %v269 = vpack.c.bf16 %v231, %v228
    %v270 = vpack.c.bf16 %v239, %v236
    %v271 = vpack.c.bf16 %v247, %v244
    %v272 = vpack.c.bf16 %v255, %v252
    %v273 = vpack.c.bf16 %v263, %v260
    %v282 = vunpack.c.l.b16 %v266
    %v283 = vunpack.c.h.b16 %v266
    %v284 = vunpack.c.l.b16 %v267
    %v285 = vunpack.c.h.b16 %v267
    %v286 = vunpack.c.l.b16 %v268
    %v287 = vunpack.c.h.b16 %v268
    %v288 = vunpack.c.l.b16 %v269
    %v289 = vunpack.c.h.b16 %v269
    %v290 = vunpack.c.l.b16 %v270
    %v291 = vunpack.c.h.b16 %v270
    %v292 = vunpack.c.l.b16 %v271
    %v293 = vunpack.c.h.b16 %v271
    %v294 = vunpack.c.l.b16 %v272
    %v295 = vunpack.c.h.b16 %v272
    %v296 = vunpack.c.l.b16 %v273
    %v297 = vunpack.c.h.b16 %v273
    %v298 = vpack.c.b16 %v282, %v282
    %v299 = vpack.c.b16 %v283, %v283
    %v300 = vpack.c.b16 %v284, %v284
    %v301 = vpack.c.b16 %v285, %v285
    %v302 = vpack.c.b16 %v286, %v286
    %v303 = vpack.c.b16 %v287, %v287
    %v304 = vpack.c.b16 %v288, %v288
    %v305 = vpack.c.b16 %v289, %v289
    %v306 = vpack.c.b16 %v290, %v290
    %v307 = vpack.c.b16 %v291, %v291
    %v308 = vpack.c.b16 %v292, %v292
    %v309 = vpack.c.b16 %v293, %v293
    %v310 = vpack.c.b16 %v294, %v294
    %v311 = vpack.c.b16 %v295, %v295
    %v312 = vpack.c.b16 %v296, %v296
    %v313 = vpack.c.b16 %v297, %v297
    %330 = vst [vmem:[#allocation7] sm:$0xf] %v298
    %331 = vst [vmem:[#allocation7 + $0x4] sm:$0xf] %v299
    %332 = vst [vmem:[#allocation7 + $0x8] sm:$0xf] %v300
    %333 = vst [vmem:[#allocation7 + $0xc] sm:$0xf] %v301
    %334 = vst [vmem:[#allocation7 + $0x10] sm:$0xf] %v302
    %335 = vst [vmem:[#allocation7 + $0x14] sm:$0xf] %v303
    %336 = vst [vmem:[#allocation7 + $0x18] sm:$0xf] %v304
    %337 = vst [vmem:[#allocation7 + $0x1c] sm:$0xf] %v305
    %338 = vst [vmem:[#allocation7 + $0x20] sm:$0xf] %v306
    %339 = vst [vmem:[#allocation7 + $0x24] sm:$0xf] %v307
    %340 = vst [vmem:[#allocation7 + $0x28] sm:$0xf] %v308
    %341 = vst [vmem:[#allocation7 + $0x2c] sm:$0xf] %v309
    %342 = vst [vmem:[#allocation7 + $0x30] sm:$0xf] %v310
    %343 = vst [vmem:[#allocation7 + $0x34] sm:$0xf] %v311
    %344 = vst [vmem:[#allocation7 + $0x38] sm:$0xf] %v312
    %345 = vst [vmem:[#allocation7 + $0x3c] sm:$0xf] %v313
    // Predicated region
    $region18: #{tpu_custom_call.1} parent=1 // pred_check
      _
    $region19: #{tpu_custom_call.1} parent=1 // pred_check_branch
      %347 = sbr.rel (0) target = $region21
    $region20: #{tpu_custom_call.1} parent=1 // pred_region
      %s349 = ssub.s32 1024, 1024
      %350 = vsyncadd [#allocation4], %s349
      %s351 = sshll.u32 [#allocation7], 4
      %s352 = int_to_ptr.vmem [resolvable:$true] %s351
      %357 = dma.vmem_to_hbm [thread:$0]  %s352, 1024, %s2, [#allocation4], 64, 64, 4
    $region21: #{tpu_custom_call.1} parent=1 // pred_fallthru
      _
    // Predicated region
    $region22: #{tpu_custom_call.1} parent=1 // pred_check
      _
    $region23: #{tpu_custom_call.1} parent=1 // pred_check_branch
      %359 = sbr.rel (0) target = $region25
    $region24: #{tpu_custom_call.1} parent=1 // pred_region
      %360 = dma.done [#allocation4], 1024
    $region25: #{tpu_custom_call.1} parent=1 // pred_fallthru
      _
    %361 = vsyncpa [#allocation3], 1
    %362 = vsyncpa [#allocation6], 1
    %363 = vsyncpa [#allocation4], 1

</llo_original>
